<compile_context>
chip_gen: v7x
topology: tpu7x:2x2x1
jax: 0.10.0
libtpu: 0.0.40
codegen_flags: <defaults>
</compile_context>

<pallas_src>
import jax
import jax.numpy as jnp
from jax import lax
from jax.experimental import pallas as pl
from jax.experimental.pallas import tpu as pltpu

INPUT_SIZE = 10
HIDDEN_SIZE = 32
OUTPUT_SIZE = 2

DEFAULT_TILE_B = 16384  # lane-axis batch tile; multiple of 128


def _round_up(x, m):
    return ((x + m - 1) // m) * m


def _choose_tiling(batch, requested_tile_b):
    """Pick (tile_b, b_pad, n_tiles): tile_b is a multiple of 128 that divides
    b_pad, with padding at most ~n_tiles*128 rows beyond the 128-aligned batch
    (never a full tile of padding)."""
    b_128 = _round_up(max(batch, 1), 128)
    tile_req = max(128, _round_up(int(requested_tile_b), 128))
    n_tiles = -(-b_128 // tile_req)  # cdiv
    # v7x has two TensorCores; give the "parallel" grid axis >= 2 tiles once the
    # batch is large enough that one extra ~0.35us grid step is noise.
    if n_tiles == 1 and b_128 >= 4096:
        n_tiles = 2
    tile_b = _round_up(-(-b_128 // n_tiles), 128)
    b_pad = tile_b * n_tiles
    return tile_b, b_pad, n_tiles


def _vmem_limit_bytes(tile_b):
    # Dominant per-step VMEM users:
    #   x block [tile_b, 10] f32 lane-padded to 128 -> 512 B/row, double-buffered
    #   in-kernel bf16 copy of x (~256 B/row), h [32, tile_b] f32 (~128 B/row),
    #   out [2->8, tile_b] f32 double-buffered (~64 B/row), tiny weights.
    est = tile_b * (2 * 512 + 256 + 128 + 2 * 32 + 64) + (1 << 20)
    return int(min(56 * 2 ** 20, max(32 * 2 ** 20, int(est * 1.25))))


def _mlp_kernel(x_ref, w1t_ref, b1_ref, w2t_ref, b2_ref, o_ref):
    # x_ref: [tile_b, in] f32 (native layout).  Cast to bf16 for the MXU and
    # contract on the feature axis of BOTH operands so the result is already
    # feature-major / lane-dense: h = W1 @ x^T -> [hidden, tile_b].
    xb = x_ref[...].astype(jnp.bfloat16)
    h = lax.dot_general(
        w1t_ref[...], xb,
        dimension_numbers=(((1,), (1,)), ((), ())),
        preferred_element_type=jnp.float32)
    # Bias (column vector, lane-broadcast) + ReLU in f32 (VPU).
    h = jnp.maximum(h + b1_ref[...], 0.0)
    # fc2: [out, hidden] @ [hidden, tile_b] -> [out, tile_b], f32 accumulate.
    y = jnp.dot(w2t_ref[...], h.astype(w2t_ref.dtype),
                preferred_element_type=jnp.float32)
    o_ref[...] = (y + b2_ref[...]).astype(o_ref.dtype)


def cognitive_core_forward(x, w1t, b1, w2t, b2, *, tile_b=DEFAULT_TILE_B,
                           feature_major_output=False):
    """x: [B, input_size] f32 (native PyTorch layout).
    w1t: [hidden, input], b1: [hidden]   (fc1.weight / fc1.bias)
    w2t: [output, hidden], b2: [output]  (fc2.weight / fc2.bias)
    Returns [B, output] f32 (or [output, B] if feature_major_output=True)."""
    batch = x.shape[0]
    tile_b, b_pad, n_tiles = _choose_tiling(batch, tile_b)

    # x keeps its native layout; pad only the batch (no-op when already aligned).
    if b_pad != batch:
        x = jnp.pad(x, ((0, b_pad - batch), (0, 0)))

    w1t_b = w1t.astype(jnp.bfloat16)
    w2t_b = w2t.astype(jnp.bfloat16)
    b1c = b1.reshape(HIDDEN_SIZE, 1).astype(jnp.float32)   # [hidden, 1]
    b2c = b2.reshape(OUTPUT_SIZE, 1).astype(jnp.float32)   # [output, 1]

    out_t = pl.pallas_call(
        _mlp_kernel,
        out_shape=jax.ShapeDtypeStruct((OUTPUT_SIZE, b_pad), jnp.float32),
        grid_spec=pl.GridSpec(
            grid=(n_tiles,),
            in_specs=[
                # x tile walks the batch (sublane) axis; feature axis is full.
                pl.BlockSpec((tile_b, INPUT_SIZE), lambda i: (i, 0)),
                # Weights / biases: constant index maps -> fetched once, VMEM-resident.
                pl.BlockSpec((HIDDEN_SIZE, INPUT_SIZE), lambda i: (0, 0)),
                pl.BlockSpec((HIDDEN_SIZE, 1), lambda i: (0, 0)),
                pl.BlockSpec((OUTPUT_SIZE, HIDDEN_SIZE), lambda i: (0, 0)),
                pl.BlockSpec((OUTPUT_SIZE, 1), lambda i: (0, 0)),
            ],
            # Lane-dense output tile walks the batch (lane) axis.
            out_specs=pl.BlockSpec((OUTPUT_SIZE, tile_b), lambda i: (0, i)),
        ),
        compiler_params=pltpu.CompilerParams(
            dimension_semantics=("parallel",),          # v7x: shard tiles across 2 TCs
            vmem_limit_bytes=_vmem_limit_bytes(tile_b),  # v5e default 16 MiB is too low
        ),
    )(x, w1t_b, b1c, w2t_b, b2c)

    if feature_major_output:
        # Zero extra HBM transpose pass; consumer takes [output, B].
        return out_t[:, :batch]
    return out_t[:, :batch].T   # PyTorch layout [B, output]


def init_params(key):
    # Deterministic init mimicking nn.Linear's uniform(-1/sqrt(fan_in), 1/sqrt(fan_in)).
    # Weights stored in PyTorch layout [out_features, in_features].
    k1, k2, k3, k4 = jax.random.split(key, 4)
    bound1 = 1.0 / jnp.sqrt(INPUT_SIZE)
    bound2 = 1.0 / jnp.sqrt(HIDDEN_SIZE)
    w1t = jax.random.uniform(k1, (HIDDEN_SIZE, INPUT_SIZE), jnp.float32, -bound1, bound1)
    b1 = jax.random.uniform(k2, (HIDDEN_SIZE,), jnp.float32, -bound1, bound1)
    w2t = jax.random.uniform(k3, (OUTPUT_SIZE, HIDDEN_SIZE), jnp.float32, -bound2, bound2)
    b2 = jax.random.uniform(k4, (OUTPUT_SIZE,), jnp.float32, -bound2, bound2)
    return w1t, b1, w2t, b2


def reference_forward(x, w1t, b1, w2t, b2):
    # Mirrors the kernel's bf16-operand / f32-accumulate semantics.
    xb = x.astype(jnp.bfloat16).astype(jnp.float32)
    w1 = w1t.astype(jnp.bfloat16).astype(jnp.float32)
    w2 = w2t.astype(jnp.bfloat16).astype(jnp.float32)
    h = jnp.maximum(xb @ w1.T + b1, 0.0)
    hb = h.astype(jnp.bfloat16).astype(jnp.float32)
    return hb @ w2.T + b2


if __name__ == "__main__":
    key = jax.random.PRNGKey(0)
    kx, kp = jax.random.split(key)
    w1t, b1, w2t, b2 = init_params(kp)

    # Small single-tile case (B=8): pads to one 128-wide lane tile.
    batch = 8
    x = jax.random.normal(kx, (batch, INPUT_SIZE), jnp.float32)
    out = jax.block_until_ready(cognitive_core_forward(x, w1t, b1, w2t, b2))
    ref = reference_forward(x, w1t, b1, w2t, b2)
    assert out.shape == (batch, OUTPUT_SIZE)
    assert jnp.allclose(out, ref, atol=1e-3, rtol=1e-3)

    # Multi-tile ragged batch: grid > 1, batch 300 padded only to 384 (not tile_b).
    batch2 = 300
    x2 = jax.random.normal(jax.random.PRNGKey(1), (batch2, INPUT_SIZE), jnp.float32)
    out2 = jax.block_until_ready(
        cognitive_core_forward(x2, w1t, b1, w2t, b2, tile_b=128))
    ref2 = reference_forward(x2, w1t, b1, w2t, b2)
    assert out2.shape == (batch2, OUTPUT_SIZE)
    assert jnp.allclose(out2, ref2, atol=1e-3, rtol=1e-3)

    # Feature-major ([out, B]) fused-output path (skips the trailing transpose pass).
    out2_fm = jax.block_until_ready(
        cognitive_core_forward(x2, w1t, b1, w2t, b2, tile_b=128,
                               feature_major_output=True))
    assert out2_fm.shape == (OUTPUT_SIZE, batch2)
    assert jnp.allclose(out2_fm, ref2.T, atol=1e-3, rtol=1e-3)

    print("KERNEL_OK")
</pallas_src>

<mosaic_0001>
module attributes {stable_mosaic.version = 11 : i64} {
  func.func @_mlp_kernel(%arg0: i32, %arg1: memref<128x10xf32, #tpu.memory_space<vmem>>, %arg2: memref<32x10xbf16, #tpu.memory_space<vmem>>, %arg3: memref<32x1xf32, #tpu.memory_space<vmem>>, %arg4: memref<2x32xbf16, #tpu.memory_space<vmem>>, %arg5: memref<2x1xf32, #tpu.memory_space<vmem>>, %arg6: memref<2x128xf32, #tpu.memory_space<vmem>>) attributes {dimension_semantics = [#tpu.dimension_semantics<parallel>], iteration_bounds = array<i64: 1>, scalar_prefetch = 0 : i64, scratch_operands = 0 : i64, tpu.core_type = #tpu.core_type<tc>, window_params = [{transform_indices = @transform_0, window_bounds = array<i64: 128, 10>}, {pipeline_mode = #tpu.pipeline_mode<synchronous>, transform_indices = @transform_1, window_bounds = array<i64: 32, 10>}, {pipeline_mode = #tpu.pipeline_mode<synchronous>, transform_indices = @transform_2, window_bounds = array<i64: 32, 1>}, {pipeline_mode = #tpu.pipeline_mode<synchronous>, transform_indices = @transform_3, window_bounds = array<i64: 2, 32>}, {pipeline_mode = #tpu.pipeline_mode<synchronous>, transform_indices = @transform_4, window_bounds = array<i64: 2, 1>}, {transform_indices = @transform_5, window_bounds = array<i64: 2, 128>}]} {
    %c0 = arith.constant 0 : index
    %c0_0 = arith.constant 0 : index
    %0 = vector.load %arg1[%c0, %c0_0] : memref<128x10xf32, #tpu.memory_space<vmem>>, vector<128x10xf32>
    %1 = arith.truncf %0 : vector<128x10xf32> to vector<128x10xbf16>
    %c0_1 = arith.constant 0 : index
    %c0_2 = arith.constant 0 : index
    %2 = vector.load %arg2[%c0_1, %c0_2] : memref<32x10xbf16, #tpu.memory_space<vmem>>, vector<32x10xbf16>
    %cst = arith.constant dense<0.000000e+00> : vector<32x128xf32>
    %3 = tpu.matmul %2, %1, %cst {dimension_numbers = #tpu.dot_dimension_numbers<[1], [1], [0], [0], [0, 0, 1, 0], [], []>} : vector<32x10xbf16>, vector<128x10xbf16>, vector<32x128xf32> -> vector<32x128xf32>
    %c0_3 = arith.constant 0 : index
    %c0_4 = arith.constant 0 : index
    %4 = vector.load %arg3[%c0_3, %c0_4] : memref<32x1xf32, #tpu.memory_space<vmem>>, vector<32x1xf32>
    %5 = vector.broadcast %4 : vector<32x1xf32> to vector<32x128xf32>
    %6 = arith.addf %3, %5 : vector<32x128xf32>
    %cst_5 = arith.constant 0.000000e+00 : f32
    %7 = vector.broadcast %cst_5 : f32 to vector<32x128xf32>
    %8 = arith.maximumf %6, %7 : vector<32x128xf32>
    %c0_6 = arith.constant 0 : index
    %c0_7 = arith.constant 0 : index
    %9 = vector.load %arg4[%c0_6, %c0_7] : memref<2x32xbf16, #tpu.memory_space<vmem>>, vector<2x32xbf16>
    %10 = arith.truncf %8 : vector<32x128xf32> to vector<32x128xbf16>
    %cst_8 = arith.constant dense<0.000000e+00> : vector<2x128xf32>
    %11 = tpu.matmul %9, %10, %cst_8 {dimension_numbers = #tpu.dot_dimension_numbers<[1], [0], [0], [1], [0, 0, 1, 1], [], []>} : vector<2x32xbf16>, vector<32x128xbf16>, vector<2x128xf32> -> vector<2x128xf32>
    %c0_9 = arith.constant 0 : index
    %c0_10 = arith.constant 0 : index
    %12 = vector.load %arg5[%c0_9, %c0_10] : memref<2x1xf32, #tpu.memory_space<vmem>>, vector<2x1xf32>
    %13 = vector.broadcast %12 : vector<2x1xf32> to vector<2x128xf32>
    %14 = arith.addf %11, %13 : vector<2x128xf32>
    %c0_11 = arith.constant 0 : index
    %c0_12 = arith.constant 0 : index
    %15 = vector.load %arg6[%c0_11, %c0_12] : memref<2x128xf32, #tpu.memory_space<vmem>>, vector<2x128xf32>
    tpu.vector_store %arg6[%c0_11, %c0_12], %14 {strides = array<i32>} : memref<2x128xf32, #tpu.memory_space<vmem>>, vector<2x128xf32>,
    return
  }
  func.func @transform_0(%arg0: i32) -> (i32, i32) {
    %c0_i32 = arith.constant 0 : i32
    %c0_i32_0 = arith.constant 0 : i32
    return %arg0, %c0_i32 : i32, i32
  }
  func.func @transform_1(%arg0: i32) -> (i32, i32) {
    %c0_i32 = arith.constant 0 : i32
    %c0_i32_0 = arith.constant 0 : i32
    %c0_i32_1 = arith.constant 0 : i32
    return %c0_i32, %c0_i32_0 : i32, i32
  }
  func.func @transform_2(%arg0: i32) -> (i32, i32) {
    %c0_i32 = arith.constant 0 : i32
    %c0_i32_0 = arith.constant 0 : i32
    %c0_i32_1 = arith.constant 0 : i32
    return %c0_i32, %c0_i32_0 : i32, i32
  }
  func.func @transform_3(%arg0: i32) -> (i32, i32) {
    %c0_i32 = arith.constant 0 : i32
    %c0_i32_0 = arith.constant 0 : i32
    %c0_i32_1 = arith.constant 0 : i32
    return %c0_i32, %c0_i32_0 : i32, i32
  }
  func.func @transform_4(%arg0: i32) -> (i32, i32) {
    %c0_i32 = arith.constant 0 : i32
    %c0_i32_0 = arith.constant 0 : i32
    %c0_i32_1 = arith.constant 0 : i32
    return %c0_i32, %c0_i32_0 : i32, i32
  }
  func.func @transform_5(%arg0: i32) -> (i32, i32) {
    %c0_i32 = arith.constant 0 : i32
    %c0_i32_0 = arith.constant 0 : i32
    return %c0_i32, %arg0 : i32, i32
  }
}

</mosaic_0001>

<llo_original>
// kernel: tpu_custom_call.1
$region0: #{tpu_custom_call.1}
  #allocation0 [shape = 'u32[]', space=smem, size = 0x4, offset = 0x4, fixed_abs, tag = 'smem constant byte address 0x4 - core index']
  #allocation1 [shape = 'u32[144,128]{1,0:T(1,128)}', space=vmem, size = 0x12000, scoped, tag = 'internal scratch']
  %s0 = inlined_call_operand.vmem [shape: f32[128,10], index: 0, kind: input, shape index: {}]
  %s1 = inlined_call_operand.vmem [shape: bf16[32,10], index: 1, kind: input, shape index: {}]
  %s2 = inlined_call_operand.vmem [shape: f32[32,1], index: 2, kind: input, shape index: {}]
  %s3 = inlined_call_operand.vmem [shape: bf16[2,32], index: 3, kind: input, shape index: {}]
  %s4 = inlined_call_operand.vmem [shape: f32[2,1], index: 4, kind: input, shape index: {}]
  %s5 = inlined_call_operand.hbm [shape: f32[2,128], index: 5, kind: output, shape index: {}]
  %s6 = sld [smem:[#allocation0]]
  $region30: #{tpu_custom_call.1} parent=0
    _
  %s8 = ssub.s32 1, %s6
  %s9 = scalar_select 0, %s8, %s6
  $region1: #{tpu_custom_call.1} parent=0
    #allocation2 [shape = 'u8[1024]{0}', space=vmem, size = 0x400, scoped, tag = 'output window, operand 0, single buffered']
    #allocation3 [shape = 's32[1]{0}', space=sflag, size = 0x4, scoped, tag = 'scoped memory for tpu_custom_call.1']
    %10 = vsyncpa [#allocation3], 0
    // Predicated region
    $region2: #{tpu_custom_call.1} parent=1 // pred_check
      _
    $region3: #{tpu_custom_call.1} parent=1 // pred_check_branch
      %12 = sbr.rel (0) target = $region5
    $region4: #{tpu_custom_call.1} parent=1 // pred_region
      _
    $region5: #{tpu_custom_call.1} parent=1 // pred_fallthru
      _
    // Predicated region
    $region6: #{tpu_custom_call.1} parent=1 // pred_check
      _
    $region7: #{tpu_custom_call.1} parent=1 // pred_check_branch
      %14 = sbr.rel (0) target = $region9
    $region8: #{tpu_custom_call.1} parent=1 // pred_region
      _
    $region9: #{tpu_custom_call.1} parent=1 // pred_fallthru
      _
    // Predicated region
    $region10: #{tpu_custom_call.1} parent=1 // pred_check
      _
    $region11: #{tpu_custom_call.1} parent=1 // pred_check_branch
      %16 = sbr.rel (0) target = $region13
    $region12: #{tpu_custom_call.1} parent=1 // pred_region
      _
    $region13: #{tpu_custom_call.1} parent=1 // pred_fallthru
      _
    // Predicated region
    $region14: #{tpu_custom_call.1} parent=1 // pred_check
      _
    $region15: #{tpu_custom_call.1} parent=1 // pred_check_branch
      %18 = sbr.rel (0) target = $region17
    $region16: #{tpu_custom_call.1} parent=1 // pred_region
      _
    $region17: #{tpu_custom_call.1} parent=1 // pred_fallthru
      _
    // Predicated region
    $region18: #{tpu_custom_call.1} parent=1 // pred_check
      _
    $region19: #{tpu_custom_call.1} parent=1 // pred_check_branch
      %20 = sbr.rel (0) target = $region21
    $region20: #{tpu_custom_call.1} parent=1 // pred_region
      _
    $region21: #{tpu_custom_call.1} parent=1 // pred_fallthru
      _
    %v22 = vld [vmem:[%s0] sm:$0xff]
    %v23 = vld [vmem:[%s0 + $0x8] sm:$0xff]
    %v24 = vld [vmem:[%s0 + $0x10] sm:$0xff]
    %v25 = vld [vmem:[%s0 + $0x18] sm:$0xff]
    %v26 = vld [vmem:[%s0 + $0x20] sm:$0xff]
    %v27 = vld [vmem:[%s0 + $0x28] sm:$0xff]
    %v28 = vld [vmem:[%s0 + $0x30] sm:$0xff]
    %v29 = vld [vmem:[%s0 + $0x38] sm:$0xff]
    %v30 = vld [vmem:[%s0 + $0x40] sm:$0xff]
    %v31 = vld [vmem:[%s0 + $0x48] sm:$0xff]
    %v32 = vld [vmem:[%s0 + $0x50] sm:$0xff]
    %v33 = vld [vmem:[%s0 + $0x58] sm:$0xff]
    %v34 = vld [vmem:[%s0 + $0x60] sm:$0xff]
    %v35 = vld [vmem:[%s0 + $0x68] sm:$0xff]
    %v36 = vld [vmem:[%s0 + $0x70] sm:$0xff]
    %v37 = vld [vmem:[%s0 + $0x78] sm:$0xff]
    %v38 = vpack.c.bf16 %v23, %v22
    %v39 = vpack.c.bf16 %v25, %v24
    %v40 = vpack.c.bf16 %v27, %v26
    %v41 = vpack.c.bf16 %v29, %v28
    %v42 = vpack.c.bf16 %v31, %v30
    %v43 = vpack.c.bf16 %v33, %v32
    %v44 = vpack.c.bf16 %v35, %v34
    %v45 = vpack.c.bf16 %v37, %v36
    %v46 = vld [vmem:[%s1] sm:$0xf]
    %v47 = vld [vmem:[%s1 + $0x4] sm:$0xf]
    %v48 = vld [vmem:[%s1 + $0x8] sm:$0xf]
    %v49 = vld [vmem:[%s1 + $0xc] sm:$0xf]
    %v50 = vld [vmem:[%s2] sm:$0xff]
    %v51 = vld [vmem:[%s2 + $0x8] sm:$0xff]
    %v52 = vld [vmem:[%s2 + $0x10] sm:$0xff]
    %v53 = vld [vmem:[%s2 + $0x18] sm:$0xff]
    %55 = vset.pattern.permute.xlu0 0
    %56 = vperm.xlu0 %55, %v50
    %v57 = vpop.permute.xlu0 %56
    %60 = vset.pattern.permute.xlu0 0
    %61 = vperm.xlu0 %60, %v51
    %v62 = vpop.permute.xlu0 %61
    %65 = vset.pattern.permute.xlu0 0
    %66 = vperm.xlu0 %65, %v52
    %v67 = vpop.permute.xlu0 %66
    %70 = vset.pattern.permute.xlu0 0
    %71 = vperm.xlu0 %70, %v53
    %v72 = vpop.permute.xlu0 %71
    %v78 = vunpack.c.l.b16 %v46
    %v79 = vunpack.c.l.b16 %v47
    %v80 = vunpack.c.l.b16 %v48
    %v81 = vunpack.c.l.b16 %v49
    %v82 = vpack.c.b16 %v79, %v78
    %v83 = vpack.c.b16 %v81, %v80
    %vm84 = vcmask 80896
    %v86 = vsel %vm84, %v82, 0
    %v89 = vsel %vm84, %v83, 0
    %v92 = vsel %vm84, %v38, 0
    %v95 = vsel %vm84, %v39, 0
    %v98 = vsel %vm84, %v40, 0
    %v101 = vsel %vm84, %v41, 0
    %v104 = vsel %vm84, %v42, 0
    %v107 = vsel %vm84, %v43, 0
    %v110 = vsel %vm84, %v44, 0
    %v113 = vsel %vm84, %v45, 0
    %115 = vmatprep.subr.bf16.mxu0 0
    %116 = vmatpush1.bf16.xpose.msra.mxu0 %v92
    %117 = vmatprep.subr.bf16.mxu0 0
    %118 = vmatpush1.bf16.xpose.msra.mxu0 %v95
    %119 = vmatprep.subr.bf16.mxu0 0
    %120 = vmatpush1.bf16.xpose.msra.mxu0 %v98
    %121 = vmatprep.subr.bf16.mxu0 0
    %122 = vmatpush1.bf16.xpose.msra.mxu0 %v101
    %123 = vmatprep.subr.bf16.mxu0 0
    %124 = vmatpush1.bf16.xpose.msra.mxu0 %v104
    %125 = vmatprep.subr.bf16.mxu0 0
    %126 = vmatpush1.bf16.xpose.msra.mxu0 %v107
    %127 = vmatprep.subr.bf16.mxu0 0
    %128 = vmatpush1.bf16.xpose.msra.mxu0 %v110
    %129 = vmatprep.subr.bf16.mxu0 0
    %130 = vmatpush1.bf16.xpose.msra.mxu0 %v113
    %131 = vmatprep.subr.bf16.mxu0 0
    %132 = vmatpush1.bf16.xpose.msra.mxu0 0
    %133 = vmatprep.subr.bf16.mxu0 0
    %134 = vmatpush1.bf16.xpose.msra.mxu0 0
    %135 = vmatprep.subr.bf16.mxu0 0
    %136 = vmatpush1.bf16.xpose.msra.mxu0 0
    %137 = vmatprep.subr.bf16.mxu0 0
    %138 = vmatpush1.bf16.xpose.msra.mxu0 0
    %139 = vmatprep.subr.bf16.mxu0 0
    %140 = vmatpush1.bf16.xpose.msra.mxu0 0
    %141 = vmatprep.subr.bf16.mxu0 0
    %142 = vmatpush1.bf16.xpose.msra.mxu0 0
    %143 = vmatprep.subr.bf16.mxu0 0
    %144 = vmatpush1.bf16.xpose.msra.mxu0 0
    %145 = vmatprep.subr.bf16.mxu0 0
    %146 = vmatpush1.bf16.xpose.msra.mxu0 0
    %147 = vmatprep.mubr.bf16.mxu0 0
    %148 = vmatmul.mubr.bf16.gmra.mrb[0].mxu0 %v86
    %v149 = vpop.f32.mrb[0].mxu0
    %v150 = vadd.f32 %v57, %v149
    %v151 = vpop.f32.mrb[0].mxu0
    %v152 = vpop.f32.mrb[0].mxu0
    %v153 = vadd.f32 %v62, %v152
    %v154 = vpop.f32.mrb[0].mxu0
    %155 = vmatprep.mubr.bf16.mxu0 0
    %156 = vmatmul.mubr.bf16.gmra.mrb[0].mxu0 %v89
    %v157 = vpop.f32.mrb[0].mxu0
    %v158 = vadd.f32 %v67, %v157
    %v159 = vpop.f32.mrb[0].mxu0
    %v160 = vpop.f32.mrb[0].mxu0
    %v161 = vadd.f32 %v72, %v160
    %v162 = vpop.f32.mrb[0].mxu0
    %163 = vdwg.mxu0
    %v164 = vmax.f32 %v150, 0.0
    %v165 = vmax.f32 %v153, 0.0
    %v166 = vmax.f32 %v158, 0.0
    %v167 = vmax.f32 %v161, 0.0
    %v168 = vld [vmem:[%s3] sm:$0x1]
    %v169 = vpack.c.bf16 %v165, %v164
    %v170 = vpack.c.bf16 %v167, %v166
    %v171 = vld [vmem:[%s4] sm:$0x3]
    %173 = vset.pattern.permute.xlu0 0
    %174 = vperm.xlu0 %173, %v171
    %v175 = vpop.permute.xlu0 %174
    %vm177 = vcmask 261120
    %v179 = vsel %vm177, %v168, 0
    %181 = vmatprep.subr.bf16.mxu0 0
    %182 = vmatpush1.bf16.msra.mxu0 %v169
    %183 = vmatprep.subr.bf16.mxu0 0
    %184 = vmatpush1.bf16.msra.mxu0 %v170
    %185 = vmatprep.subr.bf16.mxu0 0
    %186 = vmatpush1.bf16.msra.mxu0 0
    %187 = vmatprep.subr.bf16.mxu0 0
    %188 = vmatpush1.bf16.msra.mxu0 0
    %189 = vmatprep.subr.bf16.mxu0 0
    %190 = vmatpush1.bf16.msra.mxu0 0
    %191 = vmatprep.subr.bf16.mxu0 0
    %192 = vmatpush1.bf16.msra.mxu0 0
    %193 = vmatprep.subr.bf16.mxu0 0
    %194 = vmatpush1.bf16.msra.mxu0 0
    %195 = vmatprep.subr.bf16.mxu0 0
    %196 = vmatpush1.bf16.msra.mxu0 0
    %197 = vmatprep.subr.bf16.mxu0 0
    %198 = vmatpush1.bf16.msra.mxu0 0
    %199 = vmatprep.subr.bf16.mxu0 0
    %200 = vmatpush1.bf16.msra.mxu0 0
    %201 = vmatprep.subr.bf16.mxu0 0
    %202 = vmatpush1.bf16.msra.mxu0 0
    %203 = vmatprep.subr.bf16.mxu0 0
    %204 = vmatpush1.bf16.msra.mxu0 0
    %205 = vmatprep.subr.bf16.mxu0 0
    %206 = vmatpush1.bf16.msra.mxu0 0
    %207 = vmatprep.subr.bf16.mxu0 0
    %208 = vmatpush1.bf16.msra.mxu0 0
    %209 = vmatprep.subr.bf16.mxu0 0
    %210 = vmatpush1.bf16.msra.mxu0 0
    %211 = vmatprep.subr.bf16.mxu0 0
    %212 = vmatpush1.bf16.msra.mxu0 0
    %213 = vmatprep.mubr.bf16.mxu0 0
    %214 = vmatmul.mubr.bf16.gmra.mrb[0].mxu0 %v179
    %v215 = vpop.f32.mrb[0].mxu0
    %v216 = vadd.f32 %v175, %v215
    %v217 = vpop.f32.mrb[0].mxu0
    %v218 = vpop.f32.mrb[0].mxu0
    %v219 = vpop.f32.mrb[0].mxu0
    %220 = vdwg.mxu0
    %221 = vst [vmem:[#allocation2] sm:$0x3] %v216
    // Predicated region
    $region22: #{tpu_custom_call.1} parent=1 // pred_check
      _
    $region23: #{tpu_custom_call.1} parent=1 // pred_check_branch
      %223 = sbr.rel (0) target = $region25
    $region24: #{tpu_custom_call.1} parent=1 // pred_region
      %s225 = ssub.s32 32, 32
      %226 = vsyncadd [#allocation3], %s225
      %s228 = sshll.u32 [#allocation2], 4
      %s229 = int_to_ptr.vmem [resolvable:$true] %s228
      %231 = dma.vmem_to_hbm [thread:$0]  %s229, 32, %s5, [#allocation3]
    $region25: #{tpu_custom_call.1} parent=1 // pred_fallthru
      _
    // Predicated region
    $region26: #{tpu_custom_call.1} parent=1 // pred_check
      _
    $region27: #{tpu_custom_call.1} parent=1 // pred_check_branch
      %233 = sbr.rel (0) target = $region29
    $region28: #{tpu_custom_call.1} parent=1 // pred_region
      %234 = dma.done [#allocation3], 32
    $region29: #{tpu_custom_call.1} parent=1 // pred_fallthru
      _
    %235 = vsyncpa [#allocation3], 1

</llo_original>
